<compile_context>
chip_gen: v5e
topology: v5e:2x2
jax: 0.10.0
libtpu: 0.0.40
codegen_flags: <defaults>
</compile_context>

<pallas_src>
import functools

import jax
import jax.numpy as jnp
from jax import lax
from jax.experimental import pallas as pl
from jax.experimental.pallas import tpu as pltpu


def _pred_layer_kernel(x_ref, w_ref, b_ref, y_ref, scores_ref, loss_ref,
                       m_sc, l_sc, tgt_sc, acc_sc, *, n_rows):
    """One (token-block i, vocab-block j) step.

    x_ref:      (bn, D)       token embeddings
    w_ref:      (bv, D)       projection weight slab (PyTorch (V, D) layout)
    b_ref:      (1, bv)       projection bias slab
    y_ref:      (bn, 1) int32 targets
    scores_ref: (bn, bv)      logits output tile (lane-dense, bv % 128 == 0)
    loss_ref:   (1, 1)        mean cross-entropy (written at the last step)
    m_sc/l_sc/tgt_sc: (bn, 1) online-LSE max / sum-exp / target-logit scratch
    acc_sc:     (1, 1)        running sum of per-row losses
    """
    i = pl.program_id(0)          # token-block index
    j = pl.program_id(1)          # vocab-block index (reduction axis, last)
    ni = pl.num_programs(0)
    nj = pl.num_programs(1)

    @pl.when(jnp.logical_and(i == 0, j == 0))
    def _():
        acc_sc[...] = jnp.zeros(acc_sc.shape, dtype=acc_sc.dtype)

    @pl.when(j == 0)
    def _():
        m_sc[...] = jnp.full(m_sc.shape, -jnp.inf, dtype=m_sc.dtype)
        l_sc[...] = jnp.zeros(l_sc.shape, dtype=l_sc.dtype)
        tgt_sc[...] = jnp.zeros(tgt_sc.shape, dtype=tgt_sc.dtype)

    # --- single MXU matmul: scores = x @ W^T + b (f32 accumulate) ---
    s = jnp.einsum('nd,vd->nv', x_ref[...], w_ref[...],
                   preferred_element_type=jnp.float32)
    s = s + b_ref[...].astype(jnp.float32)
    scores_ref[...] = s.astype(scores_ref.dtype)

    # --- online logsumexp over the vocab axis ---
    m_prev = m_sc[...]
    m_new = jnp.maximum(m_prev, s.max(axis=-1, keepdims=True))
    l_sc[...] = (l_sc[...] * jnp.exp(m_prev - m_new)
                 + jnp.exp(s - m_new).sum(axis=-1, keepdims=True))
    m_sc[...] = m_new

    # --- gather target logits via one-hot compare (no in-kernel gather) ---
    bv = s.shape[1]
    cols = j * bv + lax.broadcasted_iota(jnp.int32, s.shape, 1)
    hit = cols == y_ref[...]                        # (bn, bv) via broadcast
    tgt_sc[...] = tgt_sc[...] + jnp.sum(
        jnp.where(hit, s, 0.0), axis=-1, keepdims=True)

    # --- end of this token-block's vocab sweep: accumulate its loss sum ---
    @pl.when(j == nj - 1)
    def _():
        row_loss = m_sc[...] + jnp.log(l_sc[...]) - tgt_sc[...]     # (bn, 1)
        acc_sc[...] = acc_sc[...] + jnp.sum(row_loss)

    # --- very last grid step: write the mean loss ---
    @pl.when(jnp.logical_and(i == ni - 1, j == nj - 1))
    def _():
        loss_ref[...] = (acc_sc[...] * (1.0 / n_rows)).astype(loss_ref.dtype)


def pred_layer_forward(x, y, weight, bias, *, pad_index,
                       block_n=None, block_v=None):
    """PredLayer.forward (asm=False): returns (scores, loss)."""
    assert x.ndim == 2
    N, D = x.shape
    V = weight.shape[0]
    assert weight.shape == (V, D), weight.shape
    assert bias.shape == (V,), bias.shape
    assert y.shape == (N,), y.shape

    # Module's `assert (y == pad_index).sum().item() == 0` (y concrete here).
    assert int(jnp.sum(y == pad_index)) == 0

    # Tiling knobs: collapse to a single grid step at small sizes; tile the
    # vocab (with online LSE) and tokens when they grow (VMEM-safe on v7x).
    if block_n is None:
        block_n = N if N <= 256 else 256
    if block_v is None:
        block_v = V if V <= 2048 else 2048
    assert N % block_n == 0 and V % block_v == 0

    y2 = y.reshape(N, 1).astype(jnp.int32)
    b2 = bias.reshape(1, V)

    kernel = functools.partial(_pred_layer_kernel, n_rows=N)

    scores, loss = pl.pallas_call(
        kernel,
        out_shape=(jax.ShapeDtypeStruct((N, V), jnp.float32),
                   jax.ShapeDtypeStruct((1, 1), jnp.float32)),
        grid_spec=pltpu.PrefetchScalarGridSpec(
            num_scalar_prefetch=0,
            grid=(N // block_n, V // block_v),
            in_specs=[
                pl.BlockSpec((block_n, D), lambda i, j: (i, 0)),   # x
                pl.BlockSpec((block_v, D), lambda i, j: (j, 0)),   # W (V, D)
                pl.BlockSpec((1, block_v), lambda i, j: (0, j)),   # bias
                pl.BlockSpec((block_n, 1), lambda i, j: (i, 0)),   # y
            ],
            out_specs=[
                pl.BlockSpec((block_n, block_v), lambda i, j: (i, j)),  # scores
                pl.BlockSpec((1, 1), lambda i, j: (0, 0)),              # loss
            ],
            scratch_shapes=[
                pltpu.VMEM((block_n, 1), jnp.float32),   # running max
                pltpu.VMEM((block_n, 1), jnp.float32),   # running sum-exp
                pltpu.VMEM((block_n, 1), jnp.float32),   # target logit
                pltpu.VMEM((1, 1), jnp.float32),         # loss accumulator
            ],
        ),
        compiler_params=pltpu.CompilerParams(
            dimension_semantics=("arbitrary", "arbitrary")),
    )(x, weight, b2, y2)

    return scores, loss[0, 0]


def _reference(x, y, weight, bias):
    """Pure-JAX reference: Linear + cross_entropy(mean)."""
    scores = x @ weight.T + bias
    lse = jax.scipy.special.logsumexp(scores, axis=-1)
    tgt = jnp.take_along_axis(scores, y[:, None].astype(jnp.int32), axis=-1)[:, 0]
    loss = jnp.mean(lse - tgt)
    return scores, loss


if __name__ == "__main__":
    # PredLayer config: emb_dim = 32, n_words = 128, pad_index = 1,
    # tokens = batch(2) * seq(8) = 16.
    emb_dim, n_words, pad_index = 32, 128, 1
    batch, seq = 2, 8
    N = batch * seq

    key = jax.random.PRNGKey(0)
    kx, kw, kb, ky = jax.random.split(key, 4)
    x = jax.random.normal(kx, (N, emb_dim), jnp.float32)
    weight = jax.random.normal(kw, (n_words, emb_dim), jnp.float32) * 0.1
    bias = jax.random.normal(kb, (n_words,), jnp.float32) * 0.1
    # targets in [2, n_words) so none equal pad_index = 1
    y = jax.random.randint(ky, (N,), 2, n_words, dtype=jnp.int32)

    scores, loss = pred_layer_forward(x, y, weight, bias, pad_index=pad_index)
    scores, loss = jax.block_until_ready((scores, loss))

    ref_scores, ref_loss = _reference(x, y, weight, bias)
    assert scores.shape == (N, n_words), scores.shape
    assert jnp.allclose(scores, ref_scores, atol=1e-4, rtol=1e-4), \
        float(jnp.max(jnp.abs(scores - ref_scores)))
    assert jnp.allclose(loss, ref_loss, atol=1e-5, rtol=1e-5), \
        (float(loss), float(ref_loss))

    print("KERNEL_OK")
</pallas_src>

<mosaic_0001>
module attributes {stable_mosaic.version = 11 : i64} {
  func.func @_pred_layer_kernel(%arg0: i32, %arg1: i32, %arg2: memref<16x32xf32, #tpu.memory_space<vmem>>, %arg3: memref<128x32xf32, #tpu.memory_space<vmem>>, %arg4: memref<1x128xf32, #tpu.memory_space<vmem>>, %arg5: memref<16x1xi32, #tpu.memory_space<vmem>>, %arg6: memref<16x128xf32, #tpu.memory_space<vmem>>, %arg7: memref<1x1xf32, #tpu.memory_space<vmem>>, %arg8: memref<16x1xf32, #tpu.memory_space<vmem>>, %arg9: memref<16x1xf32, #tpu.memory_space<vmem>>, %arg10: memref<16x1xf32, #tpu.memory_space<vmem>>, %arg11: memref<1x1xf32, #tpu.memory_space<vmem>>) attributes {dimension_semantics = [#tpu.dimension_semantics<arbitrary>, #tpu.dimension_semantics<arbitrary>], iteration_bounds = array<i64: 1, 1>, scalar_prefetch = 0 : i64, scratch_operands = 4 : i64, tpu.core_type = #tpu.core_type<tc>, window_params = [{transform_indices = @transform_0, window_bounds = array<i64: 16, 32>}, {transform_indices = @transform_1, window_bounds = array<i64: 128, 32>}, {transform_indices = @transform_2, window_bounds = array<i64: 1, 128>}, {transform_indices = @transform_3, window_bounds = array<i64: 16, 1>}, {transform_indices = @transform_4, window_bounds = array<i64: 16, 128>}, {pipeline_mode = #tpu.pipeline_mode<synchronous>, transform_indices = @transform_5, window_bounds = array<i64: 1, 1>}]} {
    %c0_i32 = arith.constant 0 : i32
    %0 = arith.cmpi eq, %arg0, %c0_i32 : i32
    %c0_i32_0 = arith.constant 0 : i32
    %1 = arith.cmpi eq, %arg1, %c0_i32_0 : i32
    %2 = arith.andi %0, %1 : i1
    %3 = arith.extui %2 : i1 to i32
    %c0_i32_1 = arith.constant 0 : i32
    %4 = arith.cmpi ne, %3, %c0_i32_1 : i32
    scf.if %4 {
      %cst_34 = arith.constant 0.000000e+00 : f32
      %53 = vector.broadcast %cst_34 : f32 to vector<1x1xf32>
      %c0_35 = arith.constant 0 : index
      %c0_36 = arith.constant 0 : index
      %54 = vector.load %arg11[%c0_35, %c0_36] : memref<1x1xf32, #tpu.memory_space<vmem>>, vector<1x1xf32>
      tpu.vector_store %arg11[%c0_35, %c0_36], %53 {strides = array<i32>} : memref<1x1xf32, #tpu.memory_space<vmem>>, vector<1x1xf32>,
    } else {
    }
    %c0_i32_2 = arith.constant 0 : i32
    %5 = arith.cmpi eq, %arg1, %c0_i32_2 : i32
    %6 = arith.extui %5 : i1 to i32
    %c0_i32_3 = arith.constant 0 : i32
    %7 = arith.cmpi ne, %6, %c0_i32_3 : i32
    scf.if %7 {
      %cst_34 = arith.constant 0xFF800000 : f32
      %53 = vector.broadcast %cst_34 : f32 to vector<16x1xf32>
      %c0_35 = arith.constant 0 : index
      %c0_36 = arith.constant 0 : index
      %54 = vector.load %arg8[%c0_35, %c0_36] : memref<16x1xf32, #tpu.memory_space<vmem>>, vector<16x1xf32>
      tpu.vector_store %arg8[%c0_35, %c0_36], %53 {strides = array<i32>} : memref<16x1xf32, #tpu.memory_space<vmem>>, vector<16x1xf32>,
      %cst_37 = arith.constant 0.000000e+00 : f32
      %55 = vector.broadcast %cst_37 : f32 to vector<16x1xf32>
      %c0_38 = arith.constant 0 : index
      %c0_39 = arith.constant 0 : index
      %56 = vector.load %arg9[%c0_38, %c0_39] : memref<16x1xf32, #tpu.memory_space<vmem>>, vector<16x1xf32>
      tpu.vector_store %arg9[%c0_38, %c0_39], %55 {strides = array<i32>} : memref<16x1xf32, #tpu.memory_space<vmem>>, vector<16x1xf32>,
      %cst_40 = arith.constant 0.000000e+00 : f32
      %57 = vector.broadcast %cst_40 : f32 to vector<16x1xf32>
      %c0_41 = arith.constant 0 : index
      %c0_42 = arith.constant 0 : index
      %58 = vector.load %arg10[%c0_41, %c0_42] : memref<16x1xf32, #tpu.memory_space<vmem>>, vector<16x1xf32>
      tpu.vector_store %arg10[%c0_41, %c0_42], %57 {strides = array<i32>} : memref<16x1xf32, #tpu.memory_space<vmem>>, vector<16x1xf32>,
    } else {
    }
    %c0 = arith.constant 0 : index
    %c0_4 = arith.constant 0 : index
    %8 = vector.load %arg2[%c0, %c0_4] : memref<16x32xf32, #tpu.memory_space<vmem>>, vector<16x32xf32>
    %c0_5 = arith.constant 0 : index
    %c0_6 = arith.constant 0 : index
    %9 = vector.load %arg3[%c0_5, %c0_6] : memref<128x32xf32, #tpu.memory_space<vmem>>, vector<128x32xf32>
    "tpu.trace_start"() <{level = 10 : i32, message = "nd,vd->nv"}> : () -> ()
    %cst = arith.constant dense<0.000000e+00> : vector<16x128xf32>
    %10 = tpu.matmul %8, %9, %cst {dimension_numbers = #tpu.dot_dimension_numbers<[1], [1], [0], [0], [0, 0, 1, 0], [], []>} : vector<16x32xf32>, vector<128x32xf32>, vector<16x128xf32> -> vector<16x128xf32>
    "tpu.trace_stop"() : () -> ()
    %c0_7 = arith.constant 0 : index
    %c0_8 = arith.constant 0 : index
    %11 = vector.load %arg4[%c0_7, %c0_8] : memref<1x128xf32, #tpu.memory_space<vmem>>, vector<1x128xf32>
    %12 = vector.broadcast %11 : vector<1x128xf32> to vector<16x128xf32>
    %13 = arith.addf %10, %12 : vector<16x128xf32>
    %c0_9 = arith.constant 0 : index
    %c0_10 = arith.constant 0 : index
    %14 = vector.load %arg6[%c0_9, %c0_10] : memref<16x128xf32, #tpu.memory_space<vmem>>, vector<16x128xf32>
    tpu.vector_store %arg6[%c0_9, %c0_10], %13 {strides = array<i32>} : memref<16x128xf32, #tpu.memory_space<vmem>>, vector<16x128xf32>,
    %c0_11 = arith.constant 0 : index
    %c0_12 = arith.constant 0 : index
    %15 = vector.load %arg8[%c0_11, %c0_12] : memref<16x1xf32, #tpu.memory_space<vmem>>, vector<16x1xf32>
    %cst_13 = arith.constant dense<0xFF800000> : vector<16xf32>
    %16 = vector.multi_reduction <maximumf>, %13, %cst_13 [1] : vector<16x128xf32> to vector<16xf32>
    %17 = vector.shape_cast %16 : vector<16xf32> to vector<16x1xf32>
    %18 = arith.maximumf %15, %17 : vector<16x1xf32>
    %c0_14 = arith.constant 0 : index
    %c0_15 = arith.constant 0 : index
    %19 = vector.load %arg9[%c0_14, %c0_15] : memref<16x1xf32, #tpu.memory_space<vmem>>, vector<16x1xf32>
    %20 = arith.subf %15, %18 : vector<16x1xf32>
    %21 = math.exp %20 : vector<16x1xf32>
    %22 = arith.mulf %19, %21 : vector<16x1xf32>
    %23 = vector.broadcast %18 : vector<16x1xf32> to vector<16x128xf32>
    %24 = arith.subf %13, %23 : vector<16x128xf32>
    %25 = math.exp %24 : vector<16x128xf32>
    %cst_16 = arith.constant dense<0.000000e+00> : vector<16xf32>
    %26 = vector.multi_reduction <add>, %25, %cst_16 [1] : vector<16x128xf32> to vector<16xf32>
    %27 = vector.shape_cast %26 : vector<16xf32> to vector<16x1xf32>
    %28 = arith.addf %22, %27 : vector<16x1xf32>
    %c0_17 = arith.constant 0 : index
    %c0_18 = arith.constant 0 : index
    %29 = vector.load %arg9[%c0_17, %c0_18] : memref<16x1xf32, #tpu.memory_space<vmem>>, vector<16x1xf32>
    tpu.vector_store %arg9[%c0_17, %c0_18], %28 {strides = array<i32>} : memref<16x1xf32, #tpu.memory_space<vmem>>, vector<16x1xf32>,
    %c0_19 = arith.constant 0 : index
    %c0_20 = arith.constant 0 : index
    %30 = vector.load %arg8[%c0_19, %c0_20] : memref<16x1xf32, #tpu.memory_space<vmem>>, vector<16x1xf32>
    tpu.vector_store %arg8[%c0_19, %c0_20], %18 {strides = array<i32>} : memref<16x1xf32, #tpu.memory_space<vmem>>, vector<16x1xf32>,
    %c128_i32 = arith.constant 128 : i32
    %31 = arith.muli %arg1, %c128_i32 : i32
    %32 = tpu.iota {dimensions = array<i32: 1>} : vector<16x128xi32>
    %33 = vector.broadcast %31 : i32 to vector<16x128xi32>
    %34 = arith.addi %33, %32 : vector<16x128xi32>
    %c0_21 = arith.constant 0 : index
    %c0_22 = arith.constant 0 : index
    %35 = vector.load %arg5[%c0_21, %c0_22] : memref<16x1xi32, #tpu.memory_space<vmem>>, vector<16x1xi32>
    %36 = vector.broadcast %35 : vector<16x1xi32> to vector<16x128xi32>
    %37 = arith.cmpi eq, %34, %36 : vector<16x128xi32>
    %c0_23 = arith.constant 0 : index
    %c0_24 = arith.constant 0 : index
    %38 = vector.load %arg10[%c0_23, %c0_24] : memref<16x1xf32, #tpu.memory_space<vmem>>, vector<16x1xf32>
    %cst_25 = arith.constant 0.000000e+00 : f32
    %39 = vector.broadcast %cst_25 : f32 to vector<16x128xf32>
    %40 = arith.select %37, %13, %39 : vector<16x128xi1>, vector<16x128xf32>
    %cst_26 = arith.constant dense<0.000000e+00> : vector<16xf32>
    %41 = vector.multi_reduction <add>, %40, %cst_26 [1] : vector<16x128xf32> to vector<16xf32>
    %42 = vector.shape_cast %41 : vector<16xf32> to vector<16x1xf32>
    %43 = arith.addf %38, %42 : vector<16x1xf32>
    %c0_27 = arith.constant 0 : index
    %c0_28 = arith.constant 0 : index
    %44 = vector.load %arg10[%c0_27, %c0_28] : memref<16x1xf32, #tpu.memory_space<vmem>>, vector<16x1xf32>
    tpu.vector_store %arg10[%c0_27, %c0_28], %43 {strides = array<i32>} : memref<16x1xf32, #tpu.memory_space<vmem>>, vector<16x1xf32>,
    %c0_i32_29 = arith.constant 0 : i32
    %45 = arith.cmpi eq, %arg1, %c0_i32_29 : i32
    %46 = arith.extui %45 : i1 to i32
    %c0_i32_30 = arith.constant 0 : i32
    %47 = arith.cmpi ne, %46, %c0_i32_30 : i32
    scf.if %47 {
      %c0_34 = arith.constant 0 : index
      %c0_35 = arith.constant 0 : index
      %53 = vector.load %arg8[%c0_34, %c0_35] : memref<16x1xf32, #tpu.memory_space<vmem>>, vector<16x1xf32>
      %c0_36 = arith.constant 0 : index
      %c0_37 = arith.constant 0 : index
      %54 = vector.load %arg9[%c0_36, %c0_37] : memref<16x1xf32, #tpu.memory_space<vmem>>, vector<16x1xf32>
      %55 = math.log %54 : vector<16x1xf32>
      %56 = arith.addf %53, %55 : vector<16x1xf32>
      %c0_38 = arith.constant 0 : index
      %c0_39 = arith.constant 0 : index
      %57 = vector.load %arg10[%c0_38, %c0_39] : memref<16x1xf32, #tpu.memory_space<vmem>>, vector<16x1xf32>
      %58 = arith.subf %56, %57 : vector<16x1xf32>
      %c0_40 = arith.constant 0 : index
      %c0_41 = arith.constant 0 : index
      %59 = vector.load %arg11[%c0_40, %c0_41] : memref<1x1xf32, #tpu.memory_space<vmem>>, vector<1x1xf32>
      %60 = vector.shape_cast %58 : vector<16x1xf32> to vector<1x16x1xf32>
      %cst_42 = arith.constant dense<0.000000e+00> : vector<1xf32>
      %61 = vector.multi_reduction <add>, %60, %cst_42 [1, 2] : vector<1x16x1xf32> to vector<1xf32>
      %62 = vector.shape_cast %61 : vector<1xf32> to vector<1x1x1xf32>
      %63 = vector.extract %62[0, 0, 0] : f32 from vector<1x1x1xf32>
      %64 = vector.broadcast %63 : f32 to vector<1x1xf32>
      %65 = arith.addf %59, %64 : vector<1x1xf32>
      %c0_43 = arith.constant 0 : index
      %c0_44 = arith.constant 0 : index
      %66 = vector.load %arg11[%c0_43, %c0_44] : memref<1x1xf32, #tpu.memory_space<vmem>>, vector<1x1xf32>
      tpu.vector_store %arg11[%c0_43, %c0_44], %65 {strides = array<i32>} : memref<1x1xf32, #tpu.memory_space<vmem>>, vector<1x1xf32>,
    } else {
    }
    %c0_i32_31 = arith.constant 0 : i32
    %48 = arith.cmpi eq, %arg0, %c0_i32_31 : i32
    %c0_i32_32 = arith.constant 0 : i32
    %49 = arith.cmpi eq, %arg1, %c0_i32_32 : i32
    %50 = arith.andi %48, %49 : i1
    %51 = arith.extui %50 : i1 to i32
    %c0_i32_33 = arith.constant 0 : i32
    %52 = arith.cmpi ne, %51, %c0_i32_33 : i32
    scf.if %52 {
      %c0_34 = arith.constant 0 : index
      %c0_35 = arith.constant 0 : index
      %53 = vector.load %arg11[%c0_34, %c0_35] : memref<1x1xf32, #tpu.memory_space<vmem>>, vector<1x1xf32>
      %cst_36 = arith.constant 6.250000e-02 : f32
      %54 = vector.broadcast %cst_36 : f32 to vector<1x1xf32>
      %55 = arith.mulf %53, %54 : vector<1x1xf32>
      %c0_37 = arith.constant 0 : index
      %c0_38 = arith.constant 0 : index
      %56 = vector.load %arg7[%c0_37, %c0_38] : memref<1x1xf32, #tpu.memory_space<vmem>>, vector<1x1xf32>
      tpu.vector_store %arg7[%c0_37, %c0_38], %55 {strides = array<i32>} : memref<1x1xf32, #tpu.memory_space<vmem>>, vector<1x1xf32>,
    } else {
    }
    return
  }
  func.func @transform_0(%arg0: i32, %arg1: i32) -> (i32, i32) {
    %c0_i32 = arith.constant 0 : i32
    %c0_i32_0 = arith.constant 0 : i32
    return %arg0, %c0_i32 : i32, i32
  }
  func.func @transform_1(%arg0: i32, %arg1: i32) -> (i32, i32) {
    %c0_i32 = arith.constant 0 : i32
    %c0_i32_0 = arith.constant 0 : i32
    return %arg1, %c0_i32 : i32, i32
  }
  func.func @transform_2(%arg0: i32, %arg1: i32) -> (i32, i32) {
    %c0_i32 = arith.constant 0 : i32
    %c0_i32_0 = arith.constant 0 : i32
    return %c0_i32, %arg1 : i32, i32
  }
  func.func @transform_3(%arg0: i32, %arg1: i32) -> (i32, i32) {
    %c0_i32 = arith.constant 0 : i32
    %c0_i32_0 = arith.constant 0 : i32
    return %arg0, %c0_i32 : i32, i32
  }
  func.func @transform_4(%arg0: i32, %arg1: i32) -> (i32, i32) {
    %c0_i32 = arith.constant 0 : i32
    return %arg0, %arg1 : i32, i32
  }
  func.func @transform_5(%arg0: i32, %arg1: i32) -> (i32, i32) {
    %c0_i32 = arith.constant 0 : i32
    %c0_i32_0 = arith.constant 0 : i32
    %c0_i32_1 = arith.constant 0 : i32
    return %c0_i32, %c0_i32_0 : i32, i32
  }
}

</mosaic_0001>

<llo_original>
// kernel: tpu_custom_call.1
$region0: #{tpu_custom_call.1}
  #allocation0 [shape = 'u32[]', space=smem, size = 0x4, offset = 0x4, fixed_abs, tag = 'smem constant byte address 0x4 - core index']
  #allocation1 [shape = 'u32[72,128]{1,0:T(1,128)}', space=vmem, size = 0x9000, scoped, tag = 'internal scratch']
  #allocation2 [shape = 'f32[16,1]{1,0:T(8,128)}', space=vmem, size = 0x2000, scoped, tag = 'scratch operand']
  #allocation3 [shape = 'f32[16,1]{1,0:T(8,128)}', space=vmem, size = 0x2000, scoped, tag = 'scratch operand']
  #allocation4 [shape = 'f32[16,1]{1,0:T(8,128)}', space=vmem, size = 0x2000, scoped, tag = 'scratch operand']
  #allocation5 [shape = 'f32[1,1]{1,0:T(1,128)}', space=vmem, size = 0x200, scoped, tag = 'scratch operand']
  %s0 = inlined_call_operand.vmem [shape: f32[16,32], index: 0, kind: input, shape index: {}]
  %s1 = inlined_call_operand.vmem [shape: f32[128,32], index: 1, kind: input, shape index: {}]
  %s2 = inlined_call_operand.vmem [shape: f32[1,128], index: 2, kind: input, shape index: {}]
  %s3 = inlined_call_operand.vmem [shape: s32[16,1], index: 3, kind: input, shape index: {}]
  %s4 = inlined_call_operand.hbm [shape: f32[16,128], index: 4, kind: output, shape index: {0}]
  %s5 = inlined_call_operand.hbm [shape: f32[1,1], index: 5, kind: output, shape index: {1}]
  %6 = xla_tuple %s4, %s5
  %s7 = sld [smem:[#allocation0]]
  $region50: #{tpu_custom_call.1} parent=0
    _
  %s9 = ssub.s32 1, %s7
  %s10 = scalar_select 0, %s9, %s7
  $region1: #{tpu_custom_call.1} parent=0
    #allocation6 [shape = 'u8[8192]{0}', space=vmem, size = 0x2000, scoped, tag = 'output window, operand 0, single buffered']
    #allocation7 [shape = 's32[1]{0}', space=sflag, size = 0x4, scoped, tag = 'scoped memory for tpu_custom_call.1']
    #allocation8 [shape = 'u8[512]{0}', space=vmem, size = 0x400, scoped, tag = 'output window, operand 1, single buffered']
    #allocation9 [shape = 's32[1]{0}', space=sflag, size = 0x4, scoped, tag = 'scoped memory for tpu_custom_call.1']
    %11 = vsyncpa [#allocation7], 0
    %12 = vsyncpa [#allocation9], 0
    // Predicated region
    $region2: #{tpu_custom_call.1} parent=1 // pred_check
      _
    $region3: #{tpu_custom_call.1} parent=1 // pred_check_branch
      %14 = sbr.rel (0) target = $region5
    $region4: #{tpu_custom_call.1} parent=1 // pred_region
      _
    $region5: #{tpu_custom_call.1} parent=1 // pred_fallthru
      _
    // Predicated region
    $region6: #{tpu_custom_call.1} parent=1 // pred_check
      _
    $region7: #{tpu_custom_call.1} parent=1 // pred_check_branch
      %16 = sbr.rel (0) target = $region9
    $region8: #{tpu_custom_call.1} parent=1 // pred_region
      _
    $region9: #{tpu_custom_call.1} parent=1 // pred_fallthru
      _
    // Predicated region
    $region10: #{tpu_custom_call.1} parent=1 // pred_check
      _
    $region11: #{tpu_custom_call.1} parent=1 // pred_check_branch
      %18 = sbr.rel (0) target = $region13
    $region12: #{tpu_custom_call.1} parent=1 // pred_region
      _
    $region13: #{tpu_custom_call.1} parent=1 // pred_fallthru
      _
    // Predicated region
    $region14: #{tpu_custom_call.1} parent=1 // pred_check
      _
    $region15: #{tpu_custom_call.1} parent=1 // pred_check_branch
      %20 = sbr.rel (0) target = $region17
    $region16: #{tpu_custom_call.1} parent=1 // pred_region
      _
    $region17: #{tpu_custom_call.1} parent=1 // pred_fallthru
      _
    %p21 = scmp.eq.s32.totalorder 0, 0
    %p22 = scmp.eq.s32.totalorder 0, 0
    %p23 = pnand %p21, %p22
    %p24 = pneg %p23
    // Predicated region
    $region18: #{tpu_custom_call.1} parent=1 // pred_check
      _
    $region19: #{tpu_custom_call.1} parent=1 // pred_check_branch
      %26 = sbr.rel (%p23) target = $region21
    $region20: #{tpu_custom_call.1} parent=1 // pred_region
      %vm27 = vcmask 0
      %28 = vst.msk [vmem:[#allocation5] sm:$0x1] %vm27, 0.0
    $region21: #{tpu_custom_call.1} parent=1 // pred_fallthru
      _
    // Predicated region
    $region22: #{tpu_custom_call.1} parent=1 // pred_check
      %p29 = pneg %p22
    $region23: #{tpu_custom_call.1} parent=1 // pred_check_branch
      %31 = sbr.rel (%p29) target = $region25
    $region24: #{tpu_custom_call.1} parent=1 // pred_region
      %vm32 = vcmask 7168
      %33 = vst.msk [vmem:[#allocation2] sm:$0xff] %vm32, -inf
      %34 = vst.msk [vmem:[#allocation2 + $0x8] sm:$0xff] %vm32, -inf
      %35 = vst.msk [vmem:[#allocation3] sm:$0xff] %vm32, 0.0
      %36 = vst.msk [vmem:[#allocation3 + $0x8] sm:$0xff] %vm32, 0.0
      %37 = vst.msk [vmem:[#allocation4] sm:$0xff] %vm32, 0.0
      %38 = vst.msk [vmem:[#allocation4 + $0x8] sm:$0xff] %vm32, 0.0
    $region25: #{tpu_custom_call.1} parent=1 // pred_fallthru
      _
    %v39 = vld [vmem:[%s0] sm:$0xff]
    %v40 = vld [vmem:[%s0 + $0x8] sm:$0xff]
    %v41 = vld [vmem:[%s1] sm:$0xff]
    %v42 = vld [vmem:[%s1 + $0x8] sm:$0xff]
    %v43 = vld [vmem:[%s1 + $0x10] sm:$0xff]
    %v44 = vld [vmem:[%s1 + $0x18] sm:$0xff]
    %v45 = vld [vmem:[%s1 + $0x20] sm:$0xff]
    %v46 = vld [vmem:[%s1 + $0x28] sm:$0xff]
    %v47 = vld [vmem:[%s1 + $0x30] sm:$0xff]
    %v48 = vld [vmem:[%s1 + $0x38] sm:$0xff]
    %v49 = vld [vmem:[%s1 + $0x40] sm:$0xff]
    %v50 = vld [vmem:[%s1 + $0x48] sm:$0xff]
    %v51 = vld [vmem:[%s1 + $0x50] sm:$0xff]
    %v52 = vld [vmem:[%s1 + $0x58] sm:$0xff]
    %v53 = vld [vmem:[%s1 + $0x60] sm:$0xff]
    %v54 = vld [vmem:[%s1 + $0x68] sm:$0xff]
    %v55 = vld [vmem:[%s1 + $0x70] sm:$0xff]
    %v56 = vld [vmem:[%s1 + $0x78] sm:$0xff]
    %v57 = vld [vmem:[%s2] sm:$0x1]
    %v59 = vperm.slane %v57, 0
    %vm61 = vcmask 261120
    %v63 = vsel %vm61, %v39, 0
    %v66 = vsel %vm61, %v40, 0
    %v69 = vsel %vm61, %v41, 0
    %v72 = vsel %vm61, %v42, 0
    %v75 = vsel %vm61, %v43, 0
    %v78 = vsel %vm61, %v44, 0
    %v81 = vsel %vm61, %v45, 0
    %v84 = vsel %vm61, %v46, 0
    %v87 = vsel %vm61, %v47, 0
    %v90 = vsel %vm61, %v48, 0
    %v93 = vsel %vm61, %v49, 0
    %v96 = vsel %vm61, %v50, 0
    %v99 = vsel %vm61, %v51, 0
    %v102 = vsel %vm61, %v52, 0
    %v105 = vsel %vm61, %v53, 0
    %v108 = vsel %vm61, %v54, 0
    %v111 = vsel %vm61, %v55, 0
    %v114 = vsel %vm61, %v56, 0
    %116 = vmatpush.xpose.msra.mxu0 %v114
    %117 = vmatpush.xpose.msra.mxu0 %v111
    %118 = vmatpush.xpose.msra.mxu0 %v108
    %119 = vmatpush.xpose.msra.mxu0 %v105
    %120 = vmatpush.xpose.msra.mxu0 %v102
    %121 = vmatpush.xpose.msra.mxu0 %v99
    %122 = vmatpush.xpose.msra.mxu0 %v96
    %123 = vmatpush.xpose.msra.mxu0 %v93
    %124 = vmatpush.xpose.msra.mxu0 %v90
    %125 = vmatpush.xpose.msra.mxu0 %v87
    %126 = vmatpush.xpose.msra.mxu0 %v84
    %127 = vmatpush.xpose.msra.mxu0 %v81
    %128 = vmatpush.xpose.msra.mxu0 %v78
    %129 = vmatpush.xpose.msra.mxu0 %v75
    %130 = vmatpush.xpose.msra.mxu0 %v72
    %131 = vmatpush.xpose.msra.mxu0 %v69
    %132 = vmatmul.f32.gmra.mxu0 %v63
    %v133 = vpop.f32.mrf.mxu0
    %v134 = vadd.f32 %v59, %v133
    %135 = vmatmul.f32.gmra.mxu0 %v66
    %v136 = vpop.f32.mrf.mxu0
    %v137 = vadd.f32 %v59, %v136
    %138 = vdwg.mxu0
    %139 = vst [vmem:[#allocation6] sm:$0xff] %v134
    %140 = vst [vmem:[#allocation6 + $0x8] sm:$0xff] %v137
    %v141 = vld [vmem:[#allocation2] sm:$0xff]
    %v142 = vld [vmem:[#allocation2 + $0x8] sm:$0xff]
    %143 = vmax.xlane.f32.xlu0 %v134
    %v144 = vpop.xlane.xlu0 %143
    %145 = vmax.xlane.f32.xlu0 %v137
    %v146 = vpop.xlane.xlu0 %145
    %v147 = vmax.f32 %v141, %v144
    %v148 = vmax.f32 %v142, %v146
    %v149 = vld [vmem:[#allocation3] sm:$0xff]
    %v150 = vld [vmem:[#allocation3 + $0x8] sm:$0xff]
    %v151 = vsub.f32 %v141, %v147
    %v152 = vsub.f32 %v142, %v148
    %v153 = vmul.f32 %v151, 1.442695
    %v154 = vpow.pop %v153
    %v155 = vmul.f32 %v152, 1.442695
    %v156 = vpow.pop %v155
    %v157 = vmul.f32 %v149, %v154
    %v158 = vmul.f32 %v150, %v156
    %160 = vset.pattern.permute.xlu0 0
    %161 = vperm.xlu0 %160, %v147
    %v162 = vpop.permute.xlu0 %161
    %165 = vset.pattern.permute.xlu0 0
    %166 = vperm.xlu0 %165, %v148
    %v167 = vpop.permute.xlu0 %166
    %v169 = vsub.f32 %v134, %v162
    %v170 = vsub.f32 %v137, %v167
    %v171 = vmul.f32 %v169, 1.442695
    %v172 = vpow.pop %v171
    %v173 = vmul.f32 %v170, 1.442695
    %v174 = vpow.pop %v173
    %175 = vadd.xlane.f32.xlu0 %v172
    %v176 = vpop.xlane.xlu0 %175
    %177 = vadd.xlane.f32.xlu0 %v174
    %v178 = vpop.xlane.xlu0 %177
    %v179 = vadd.f32 %v157, %v176
    %v180 = vadd.f32 %v158, %v178
    %vm181 = vcmask 7168
    %182 = vst.msk [vmem:[#allocation3] sm:$0xff] %vm181, %v179
    %183 = vst.msk [vmem:[#allocation3 + $0x8] sm:$0xff] %vm181, %v180
    %184 = vst.msk [vmem:[#allocation2] sm:$0xff] %vm181, %v147
    %185 = vst.msk [vmem:[#allocation2 + $0x8] sm:$0xff] %vm181, %v148
    %s186 = smul.u32 0, 128
    %v187 = vlaneseq
    %v188 = vand.u32 %v187, 127
    %v189 = vstv %s186
    %v190 = vadd.s32 %v189, %v188
    %v191 = vld [vmem:[%s3] sm:$0xff]
    %v192 = vld [vmem:[%s3 + $0x8] sm:$0xff]
    %193 = vset.pattern.permute.xlu0 0
    %194 = vperm.xlu0 %193, %v191
    %v195 = vpop.permute.xlu0 %194
    %196 = vset.pattern.permute.xlu0 0
    %197 = vperm.xlu0 %196, %v192
    %v198 = vpop.permute.xlu0 %197
    %vm199 = vcmp.eq.s32.totalorder %v190, %v195
    %vm200 = vcmp.eq.s32.totalorder %v190, %v198
    %v201 = vld [vmem:[#allocation4] sm:$0xff]
    %v202 = vld [vmem:[#allocation4 + $0x8] sm:$0xff]
    %v203 = vsel %vm199, %v134, 0.0
    %v204 = vsel %vm200, %v137, 0.0
    %205 = vadd.xlane.f32.xlu0 %v203
    %v206 = vpop.xlane.xlu0 %205
    %207 = vadd.xlane.f32.xlu0 %v204
    %v208 = vpop.xlane.xlu0 %207
    %v209 = vadd.f32 %v201, %v206
    %v210 = vadd.f32 %v202, %v208
    %211 = vst.msk [vmem:[#allocation4] sm:$0xff] %vm181, %v209
    %212 = vst.msk [vmem:[#allocation4 + $0x8] sm:$0xff] %vm181, %v210
    // Predicated region
    $region26: #{tpu_custom_call.1} parent=1 // pred_check
      %p213 = pneg %p22
    $region27: #{tpu_custom_call.1} parent=1 // pred_check_branch
      %215 = sbr.rel (%p213) target = $region29
    $region28: #{tpu_custom_call.1} parent=1 // pred_region
      %v216 = vld [vmem:[#allocation2] sm:$0xff]
      %v217 = vld [vmem:[#allocation2 + $0x8] sm:$0xff]
      %v218 = vld [vmem:[#allocation3] sm:$0xff]
      %v219 = vld [vmem:[#allocation3 + $0x8] sm:$0xff]
      %v220 = vlog2.pop %v218
      %v221 = vmul.f32 %v220, 0.6931472
      %v222 = vlog2.pop %v219
      %v223 = vmul.f32 %v222, 0.6931472
      %v224 = vadd.f32 %v216, %v221
      %v225 = vadd.f32 %v217, %v223
      %v226 = vld [vmem:[#allocation4] sm:$0xff]
      %v227 = vld [vmem:[#allocation4 + $0x8] sm:$0xff]
      %v228 = vsub.f32 %v224, %v226
      %v229 = vsub.f32 %v225, %v227
      %v230 = vld [vmem:[#allocation5] sm:$0x1]
      %v231 = vsel %vm181, %v228, 0.0
      %v232 = vsel %vm181, %v229, 0.0
      %v233 = vadd.f32 %v231, %v232
      %234 = vadd.xlane.f32.xlu0 %v233
      %v235 = vpop.xlane.xlu0 %234
      %v236 = vrot.slane %v235, 4
      %v237 = vadd.f32 %v235, %v236
      %v238 = vrot.slane %v237, 2
      %v239 = vadd.f32 %v237, %v238
      %v240 = vrot.slane %v239, 1
      %v241 = vadd.f32 %v239, %v240
      %s242 = vtos %v241
      %v243 = vstv %s242
      %v244 = vadd.f32 %v230, %v243
      %vm245 = vcmask 0
      %246 = vst.msk [vmem:[#allocation5] sm:$0x1] %vm245, %v244
    $region29: #{tpu_custom_call.1} parent=1 // pred_fallthru
      _
    // Predicated region
    $region30: #{tpu_custom_call.1} parent=1 // pred_check
      _
    $region31: #{tpu_custom_call.1} parent=1 // pred_check_branch
      %248 = sbr.rel (%p23) target = $region33
    $region32: #{tpu_custom_call.1} parent=1 // pred_region
      %v249 = vld [vmem:[#allocation5] sm:$0x1]
      %v250 = vmul.f32 %v249, 0.0625
      %vm251 = vcmask 0
      %252 = vst.msk [vmem:[#allocation8] sm:$0x1] %vm251, %v250
    $region33: #{tpu_custom_call.1} parent=1 // pred_fallthru
      _
    // Predicated region
    $region34: #{tpu_custom_call.1} parent=1 // pred_check
      _
    $region35: #{tpu_custom_call.1} parent=1 // pred_check_branch
      %254 = sbr.rel (0) target = $region37
    $region36: #{tpu_custom_call.1} parent=1 // pred_region
      %256 = vsyncadd [#allocation7], 0
      %s257 = sshll.u32 [#allocation6], 4
      %s258 = int_to_ptr.vmem [resolvable:$true] %s257
      %s259 = sshll.u32 %s4, 4
      %s260 = int_to_ptr.hbm [resolvable:$true] %s259
      %265 = dma.vmem_to_hbm [thread:$0]  %s258, 256, %s260, [#allocation7], 128, 128, 8
    $region37: #{tpu_custom_call.1} parent=1 // pred_fallthru
      _
    // Predicated region
    $region38: #{tpu_custom_call.1} parent=1 // pred_check
      _
    $region39: #{tpu_custom_call.1} parent=1 // pred_check_branch
      %267 = sbr.rel (0) target = $region41
    $region40: #{tpu_custom_call.1} parent=1 // pred_region
      %269 = vsyncadd [#allocation9], 0
      %s271 = sshll.u32 [#allocation8], 4
      %s272 = int_to_ptr.vmem [resolvable:$true] %s271
      %s273 = sshll.u32 %s5, 4
      %s274 = int_to_ptr.hbm [resolvable:$true] %s273
      %276 = dma.vmem_to_hbm [thread:$0]  %s272, 16, %s274, [#allocation9]
    $region41: #{tpu_custom_call.1} parent=1 // pred_fallthru
      _
    // Predicated region
    $region42: #{tpu_custom_call.1} parent=1 // pred_check
      _
    $region43: #{tpu_custom_call.1} parent=1 // pred_check_branch
      %278 = sbr.rel (0) target = $region45
    $region44: #{tpu_custom_call.1} parent=1 // pred_region
      %280 = dma.done [#allocation7], 256
    $region45: #{tpu_custom_call.1} parent=1 // pred_fallthru
      _
    // Predicated region
    $region46: #{tpu_custom_call.1} parent=1 // pred_check
      _
    $region47: #{tpu_custom_call.1} parent=1 // pred_check_branch
      %282 = sbr.rel (0) target = $region49
    $region48: #{tpu_custom_call.1} parent=1 // pred_region
      %284 = dma.done [#allocation9], 16
    $region49: #{tpu_custom_call.1} parent=1 // pred_fallthru
      _
    %285 = vsyncpa [#allocation7], 1
    %286 = vsyncpa [#allocation9], 1

</llo_original>
